<compile_context>
chip_gen: v5e
topology: v5e:2x2
jax: 0.10.0
libtpu: 0.0.40
codegen_flags: <defaults>
</compile_context>

<pallas_src>
import jax
import jax.numpy as jnp
from jax.experimental import pallas as pl
from jax.experimental.pallas import tpu as pltpu


# ---------------------------------------------------------------------------
# Fused kernel: conv-encode(premise), conv-encode(hypothesis), concat, MLP head.
# One grid step processes a block of batch rows end-to-end.
# ---------------------------------------------------------------------------
def fused_li_kernel(xp_ref, xh_ref, wc_ref, bc_ref,
                    w1_ref, b1_ref, w2_ref, b2_ref, o_ref):
    # xp_ref/xh_ref: (blk_b, Lp, E) bf16   pre-padded premise / hypothesis embeds
    # wc_ref       : (K*E, C2)      bf16   im2col conv weight
    # bc_ref       : (1, C2)        f32
    # w1_ref       : (4H, 4H)       bf16
    # b1_ref       : (1, 4H)        f32
    # w2_ref       : (4H, NCLS)     bf16
    # b2_ref       : (1, NCLS)      f32
    # o_ref        : (blk_b, NCLS)  f32
    blk_b, lp, e = xp_ref.shape
    ke, c2 = wc_ref.shape
    k = ke // e
    l = lp - (k - 1)

    # Hoisted: broadcast conv weight once for the batched MXU contraction.
    w_b = jnp.broadcast_to(wc_ref[...], (blk_b, ke, c2))          # bf16
    conv_bias = bc_ref[...][:, None, :]                           # (1, 1, C2) f32

    def encode(x):                                                # (blk_b, Lp, E) bf16
        # im2col: K shifted time-slices concatenated along lanes -> (blk_b, L, K*E)
        col = jnp.concatenate([x[:, t:t + l, :] for t in range(k)], axis=-1)
        # single batched MXU contraction, f32 accumulation
        h = jnp.einsum("blk,bkc->blc", col, w_b,
                       preferred_element_type=jnp.float32)        # (blk_b, L, C2)
        h = jnp.maximum(h + conv_bias, 0.0)                       # bias + ReLU (f32)
        return jnp.max(h, axis=1)                                 # global max-pool over time

    p_enc = encode(xp_ref[...])                                   # (blk_b, C2)
    h_enc = encode(xh_ref[...])                                   # (blk_b, C2)
    feat = jnp.concatenate([p_enc, h_enc], axis=-1)               # (blk_b, 4H=128) lane-dense

    # fc1 -> ReLU -> fc2 -> log_softmax (MXU in bf16, math in f32)
    z = jnp.dot(feat.astype(w1_ref.dtype), w1_ref[...],
                preferred_element_type=jnp.float32)
    z = jnp.maximum(z + b1_ref[...], 0.0)
    logits = jnp.dot(z.astype(w2_ref.dtype), w2_ref[...],
                     preferred_element_type=jnp.float32) + b2_ref[...]

    m = jnp.max(logits, axis=-1, keepdims=True)
    zl = logits - m
    lse = jnp.log(jnp.sum(jnp.exp(zl), axis=-1, keepdims=True))
    o_ref[...] = (zl - lse).astype(o_ref.dtype)


def _pick_block_b(batch):
    """Batch rows per grid step: whole batch when small, else a multiple of 8."""
    if batch % 8 == 0:
        for cand in (256, 128, 64, 32, 16, 8):
            if batch % cand == 0:
                return cand
    return batch


# ---------------------------------------------------------------------------
# Full forward pass (conv path). Lengths accepted for API parity only.
# ---------------------------------------------------------------------------
def language_inference_forward(params, p_indexseq, len_p, h_indexseq, len_h):
    del len_p, len_h  # only used by the (unimplemented) rnn path

    emb = params["embedding"]                      # (V, E)  bf16
    conv_w = params["conv_w"]                      # (K, E, 2H) bf16
    k, e, c2 = conv_w.shape
    pad_l = (k - 1) // 2
    pad_r = (k - 1) - pad_l                        # matches PyTorch 'same' (even K too)

    def embed_pad(idx):                            # XLA glue: gather + 'same' pad
        x = jnp.take(emb, idx, axis=0)             # (B, L, E) bf16
        return jnp.pad(x, ((0, 0), (pad_l, pad_r), (0, 0)))

    xp = embed_pad(p_indexseq)                     # (B, Lp, E)
    xh = embed_pad(h_indexseq)                     # (B, Lp, E)

    b, lp, _ = xp.shape
    h4 = 2 * c2
    ncls = params["fc2_w"].shape[-1]
    wc2 = conv_w.reshape(k * e, c2)                # im2col weight layout (K*E, C2)

    blk_b = _pick_block_b(b)
    grid = (b // blk_b,)

    return pl.pallas_call(
        fused_li_kernel,
        out_shape=jax.ShapeDtypeStruct((b, ncls), jnp.float32),
        grid=grid,
        in_specs=[
            pl.BlockSpec((blk_b, lp, e), lambda i: (i, 0, 0)),   # premise block
            pl.BlockSpec((blk_b, lp, e), lambda i: (i, 0, 0)),   # hypothesis block
            pl.BlockSpec((k * e, c2), lambda i: (0, 0)),         # conv weight (resident)
            pl.BlockSpec((1, c2), lambda i: (0, 0)),             # conv bias
            pl.BlockSpec((h4, h4), lambda i: (0, 0)),            # fc1 weight
            pl.BlockSpec((1, h4), lambda i: (0, 0)),             # fc1 bias
            pl.BlockSpec((h4, ncls), lambda i: (0, 0)),          # fc2 weight
            pl.BlockSpec((1, ncls), lambda i: (0, 0)),           # fc2 bias
        ],
        out_specs=pl.BlockSpec((blk_b, ncls), lambda i: (i, 0)),
        compiler_params=pltpu.CompilerParams(
            dimension_semantics=("parallel",)),
    )(xp, xh, wc2, params["conv_b"], params["fc1_w"], params["fc1_b"],
      params["fc2_w"], params["fc2_b"])


# ---------------------------------------------------------------------------
# Pure-JAX reference (same bf16/f32 mixed precision) for a numerical sanity check.
# ---------------------------------------------------------------------------
def reference_forward(params, p_indexseq, len_p, h_indexseq, len_h):
    del len_p, len_h
    emb = params["embedding"]
    conv_w = params["conv_w"]
    k, e, c2 = conv_w.shape
    pad_l = (k - 1) // 2
    pad_r = (k - 1) - pad_l
    wc2 = conv_w.reshape(k * e, c2)

    def enc(idx):
        x = jnp.take(emb, idx, axis=0)
        xp = jnp.pad(x, ((0, 0), (pad_l, pad_r), (0, 0)))
        l = idx.shape[1]
        col = jnp.concatenate([xp[:, t:t + l, :] for t in range(k)], axis=-1)
        h = jnp.einsum("blk,kc->blc", col, wc2, preferred_element_type=jnp.float32)
        h = jnp.maximum(h + params["conv_b"][0][None, None, :], 0.0)
        return jnp.max(h, axis=1)

    feat = jnp.concatenate([enc(p_indexseq), enc(h_indexseq)], axis=-1)
    z = jnp.maximum(jnp.dot(feat.astype(jnp.bfloat16), params["fc1_w"],
                            preferred_element_type=jnp.float32) + params["fc1_b"], 0.0)
    logits = jnp.dot(z.astype(jnp.bfloat16), params["fc2_w"],
                     preferred_element_type=jnp.float32) + params["fc2_b"]
    return jax.nn.log_softmax(logits, axis=-1)


# ---------------------------------------------------------------------------
# Deterministic parameter construction (synthetic, no checkpoint load).
# MXU weights stored in bf16; biases in f32.
# ---------------------------------------------------------------------------
def init_params(key, vocab_size, word_embdim, hidden_dim, kernel_size):
    k0, k1, k2, k3 = jax.random.split(key, 4)
    h2 = 2 * hidden_dim
    h4 = 4 * hidden_dim
    return {
        "embedding": (jax.random.normal(k0, (vocab_size, word_embdim), jnp.float32)
                      * 0.1).astype(jnp.bfloat16),
        "conv_w": (jax.random.normal(k1, (kernel_size, word_embdim, h2), jnp.float32)
                   * 0.1).astype(jnp.bfloat16),
        "conv_b": jnp.zeros((1, h2), jnp.float32),
        "fc1_w": (jax.random.normal(k2, (h4, h4), jnp.float32) * 0.05).astype(jnp.bfloat16),
        "fc1_b": jnp.zeros((1, h4), jnp.float32),
        "fc2_w": (jax.random.normal(k3, (h4, 3), jnp.float32) * 0.05).astype(jnp.bfloat16),
        "fc2_b": jnp.zeros((1, 3), jnp.float32),
    }


if __name__ == "__main__":
    # Small shapes consistent with the module's forward.
    batch, seq_len = 2, 8
    vocab_size, word_embdim, hidden_dim, kernel_size = 50, 32, 32, 3

    key = jax.random.PRNGKey(0)
    kp, kh, kparams = jax.random.split(key, 3)

    p_indexseq = jax.random.randint(kp, (batch, seq_len), 0, vocab_size, jnp.int32)
    h_indexseq = jax.random.randint(kh, (batch, seq_len), 0, vocab_size, jnp.int32)
    len_p = jnp.full((batch,), seq_len, jnp.int32)
    len_h = jnp.full((batch,), seq_len, jnp.int32)

    params = init_params(kparams, vocab_size, word_embdim, hidden_dim, kernel_size)

    fwd = jax.jit(language_inference_forward)
    log_probs = jax.block_until_ready(
        fwd(params, p_indexseq, len_p, h_indexseq, len_h))

    # Sanity: shape (batch, 3), finite, rows sum to 1 in prob space, matches reference.
    assert log_probs.shape == (batch, 3)
    assert bool(jnp.all(jnp.isfinite(log_probs)))
    row_sums = jnp.sum(jnp.exp(log_probs), axis=1)
    assert bool(jnp.all(jnp.abs(row_sums - 1.0) < 1e-3))

    ref = reference_forward(params, p_indexseq, len_p, h_indexseq, len_h)
    assert bool(jnp.max(jnp.abs(log_probs - ref)) < 2e-2)

    print("KERNEL_OK")
</pallas_src>

<mosaic_0001>
module attributes {stable_mosaic.version = 11 : i64} {
  func.func @fused_li_kernel(%arg0: i32, %arg1: memref<2x10x32xbf16, #tpu.memory_space<vmem>>, %arg2: memref<2x10x32xbf16, #tpu.memory_space<vmem>>, %arg3: memref<96x64xbf16, #tpu.memory_space<vmem>>, %arg4: memref<1x64xf32, #tpu.memory_space<vmem>>, %arg5: memref<128x128xbf16, #tpu.memory_space<vmem>>, %arg6: memref<1x128xf32, #tpu.memory_space<vmem>>, %arg7: memref<128x3xbf16, #tpu.memory_space<vmem>>, %arg8: memref<1x3xf32, #tpu.memory_space<vmem>>, %arg9: memref<2x3xf32, #tpu.memory_space<vmem>>) attributes {dimension_semantics = [#tpu.dimension_semantics<parallel>], iteration_bounds = array<i64: 1>, scalar_prefetch = 0 : i64, scratch_operands = 0 : i64, tpu.core_type = #tpu.core_type<tc>, window_params = [{transform_indices = @transform_0, window_bounds = array<i64: 2, 10, 32>}, {transform_indices = @transform_1, window_bounds = array<i64: 2, 10, 32>}, {pipeline_mode = #tpu.pipeline_mode<synchronous>, transform_indices = @transform_2, window_bounds = array<i64: 96, 64>}, {pipeline_mode = #tpu.pipeline_mode<synchronous>, transform_indices = @transform_3, window_bounds = array<i64: 1, 64>}, {pipeline_mode = #tpu.pipeline_mode<synchronous>, transform_indices = @transform_4, window_bounds = array<i64: 128, 128>}, {pipeline_mode = #tpu.pipeline_mode<synchronous>, transform_indices = @transform_5, window_bounds = array<i64: 1, 128>}, {pipeline_mode = #tpu.pipeline_mode<synchronous>, transform_indices = @transform_6, window_bounds = array<i64: 128, 3>}, {pipeline_mode = #tpu.pipeline_mode<synchronous>, transform_indices = @transform_7, window_bounds = array<i64: 1, 3>}, {transform_indices = @transform_8, window_bounds = array<i64: 2, 3>}]} {
    %c0 = arith.constant 0 : index
    %c0_0 = arith.constant 0 : index
    %0 = vector.load %arg3[%c0, %c0_0] : memref<96x64xbf16, #tpu.memory_space<vmem>>, vector<96x64xbf16>
    %1 = vector.shape_cast %0 : vector<96x64xbf16> to vector<1x96x64xbf16>
    %2 = vector.broadcast %1 : vector<1x96x64xbf16> to vector<2x96x64xbf16>
    %c0_1 = arith.constant 0 : index
    %c0_2 = arith.constant 0 : index
    %3 = vector.load %arg4[%c0_1, %c0_2] : memref<1x64xf32, #tpu.memory_space<vmem>>, vector<1x64xf32>
    %4 = vector.shape_cast %3 : vector<1x64xf32> to vector<1x1x64xf32>
    %c0_3 = arith.constant 0 : index
    %c0_4 = arith.constant 0 : index
    %c0_5 = arith.constant 0 : index
    %5 = vector.load %arg1[%c0_3, %c0_4, %c0_5] : memref<2x10x32xbf16, #tpu.memory_space<vmem>>, vector<2x10x32xbf16>
    %6 = vector.extract_strided_slice %5 {offsets = [0, 0, 0], sizes = [2, 8, 32], strides = [1, 1, 1]} : vector<2x10x32xbf16> to vector<2x8x32xbf16>
    %7 = vector.extract_strided_slice %5 {offsets = [0, 1, 0], sizes = [2, 8, 32], strides = [1, 1, 1]} : vector<2x10x32xbf16> to vector<2x8x32xbf16>
    %8 = vector.extract_strided_slice %5 {offsets = [0, 2, 0], sizes = [2, 8, 32], strides = [1, 1, 1]} : vector<2x10x32xbf16> to vector<2x8x32xbf16>
    %9 = tpu.concatenate %6, %7, %8 in 2 : vector<2x8x32xbf16>, vector<2x8x32xbf16>, vector<2x8x32xbf16> -> vector<2x8x96xbf16>
    "tpu.trace_start"() <{level = 10 : i32, message = "blk,bkc->blc"}> : () -> ()
    %cst = arith.constant dense<0.000000e+00> : vector<2x8x64xf32>
    %10 = tpu.matmul %9, %2, %cst {dimension_numbers = #tpu.dot_dimension_numbers<[2], [1], [1], [2], [0, 0, 0, 1, 1, 2], [0], [0]>} : vector<2x8x96xbf16>, vector<2x96x64xbf16>, vector<2x8x64xf32> -> vector<2x8x64xf32>
    "tpu.trace_stop"() : () -> ()
    %11 = vector.broadcast %4 : vector<1x1x64xf32> to vector<2x8x64xf32>
    %12 = arith.addf %10, %11 : vector<2x8x64xf32>
    %cst_6 = arith.constant 0.000000e+00 : f32
    %13 = vector.broadcast %cst_6 : f32 to vector<2x8x64xf32>
    %14 = arith.maximumf %12, %13 : vector<2x8x64xf32>
    %cst_7 = arith.constant dense<0xFF800000> : vector<2x64xf32>
    %15 = vector.multi_reduction <maximumf>, %14, %cst_7 [1] : vector<2x8x64xf32> to vector<2x64xf32>
    %c0_8 = arith.constant 0 : index
    %c0_9 = arith.constant 0 : index
    %c0_10 = arith.constant 0 : index
    %16 = vector.load %arg2[%c0_8, %c0_9, %c0_10] : memref<2x10x32xbf16, #tpu.memory_space<vmem>>, vector<2x10x32xbf16>
    %17 = vector.extract_strided_slice %16 {offsets = [0, 0, 0], sizes = [2, 8, 32], strides = [1, 1, 1]} : vector<2x10x32xbf16> to vector<2x8x32xbf16>
    %18 = vector.extract_strided_slice %16 {offsets = [0, 1, 0], sizes = [2, 8, 32], strides = [1, 1, 1]} : vector<2x10x32xbf16> to vector<2x8x32xbf16>
    %19 = vector.extract_strided_slice %16 {offsets = [0, 2, 0], sizes = [2, 8, 32], strides = [1, 1, 1]} : vector<2x10x32xbf16> to vector<2x8x32xbf16>
    %20 = tpu.concatenate %17, %18, %19 in 2 : vector<2x8x32xbf16>, vector<2x8x32xbf16>, vector<2x8x32xbf16> -> vector<2x8x96xbf16>
    "tpu.trace_start"() <{level = 10 : i32, message = "blk,bkc->blc"}> : () -> ()
    %cst_11 = arith.constant dense<0.000000e+00> : vector<2x8x64xf32>
    %21 = tpu.matmul %20, %2, %cst_11 {dimension_numbers = #tpu.dot_dimension_numbers<[2], [1], [1], [2], [0, 0, 0, 1, 1, 2], [0], [0]>} : vector<2x8x96xbf16>, vector<2x96x64xbf16>, vector<2x8x64xf32> -> vector<2x8x64xf32>
    "tpu.trace_stop"() : () -> ()
    %22 = vector.broadcast %4 : vector<1x1x64xf32> to vector<2x8x64xf32>
    %23 = arith.addf %21, %22 : vector<2x8x64xf32>
    %cst_12 = arith.constant 0.000000e+00 : f32
    %24 = vector.broadcast %cst_12 : f32 to vector<2x8x64xf32>
    %25 = arith.maximumf %23, %24 : vector<2x8x64xf32>
    %cst_13 = arith.constant dense<0xFF800000> : vector<2x64xf32>
    %26 = vector.multi_reduction <maximumf>, %25, %cst_13 [1] : vector<2x8x64xf32> to vector<2x64xf32>
    %27 = tpu.concatenate %15, %26 in 1 : vector<2x64xf32>, vector<2x64xf32> -> vector<2x128xf32>
    %28 = arith.truncf %27 : vector<2x128xf32> to vector<2x128xbf16>
    %c0_14 = arith.constant 0 : index
    %c0_15 = arith.constant 0 : index
    %29 = vector.load %arg5[%c0_14, %c0_15] : memref<128x128xbf16, #tpu.memory_space<vmem>>, vector<128x128xbf16>
    %cst_16 = arith.constant dense<0.000000e+00> : vector<2x128xf32>
    %30 = tpu.matmul %28, %29, %cst_16 {dimension_numbers = #tpu.dot_dimension_numbers<[1], [0], [0], [1], [0, 0, 1, 1], [], []>} : vector<2x128xbf16>, vector<128x128xbf16>, vector<2x128xf32> -> vector<2x128xf32>
    %c0_17 = arith.constant 0 : index
    %c0_18 = arith.constant 0 : index
    %31 = vector.load %arg6[%c0_17, %c0_18] : memref<1x128xf32, #tpu.memory_space<vmem>>, vector<1x128xf32>
    %32 = vector.broadcast %31 : vector<1x128xf32> to vector<2x128xf32>
    %33 = arith.addf %30, %32 : vector<2x128xf32>
    %cst_19 = arith.constant 0.000000e+00 : f32
    %34 = vector.broadcast %cst_19 : f32 to vector<2x128xf32>
    %35 = arith.maximumf %33, %34 : vector<2x128xf32>
    %36 = arith.truncf %35 : vector<2x128xf32> to vector<2x128xbf16>
    %c0_20 = arith.constant 0 : index
    %c0_21 = arith.constant 0 : index
    %37 = vector.load %arg7[%c0_20, %c0_21] : memref<128x3xbf16, #tpu.memory_space<vmem>>, vector<128x3xbf16>
    %cst_22 = arith.constant dense<0.000000e+00> : vector<2x3xf32>
    %38 = tpu.matmul %36, %37, %cst_22 {dimension_numbers = #tpu.dot_dimension_numbers<[1], [0], [0], [1], [0, 0, 1, 1], [], []>} : vector<2x128xbf16>, vector<128x3xbf16>, vector<2x3xf32> -> vector<2x3xf32>
    %c0_23 = arith.constant 0 : index
    %c0_24 = arith.constant 0 : index
    %39 = vector.load %arg8[%c0_23, %c0_24] : memref<1x3xf32, #tpu.memory_space<vmem>>, vector<1x3xf32>
    %40 = vector.broadcast %39 : vector<1x3xf32> to vector<2x3xf32>
    %41 = arith.addf %38, %40 : vector<2x3xf32>
    %cst_25 = arith.constant dense<0xFF800000> : vector<2xf32>
    %42 = vector.multi_reduction <maximumf>, %41, %cst_25 [1] : vector<2x3xf32> to vector<2xf32>
    %43 = vector.shape_cast %42 : vector<2xf32> to vector<2x1xf32>
    %44 = vector.broadcast %43 : vector<2x1xf32> to vector<2x3xf32>
    %45 = arith.subf %41, %44 : vector<2x3xf32>
    %46 = math.exp %45 : vector<2x3xf32>
    %cst_26 = arith.constant dense<0.000000e+00> : vector<2xf32>
    %47 = vector.multi_reduction <add>, %46, %cst_26 [1] : vector<2x3xf32> to vector<2xf32>
    %48 = vector.shape_cast %47 : vector<2xf32> to vector<2x1xf32>
    %49 = math.log %48 : vector<2x1xf32>
    %50 = vector.broadcast %49 : vector<2x1xf32> to vector<2x3xf32>
    %51 = arith.subf %45, %50 : vector<2x3xf32>
    %c0_27 = arith.constant 0 : index
    %c0_28 = arith.constant 0 : index
    %52 = vector.load %arg9[%c0_27, %c0_28] : memref<2x3xf32, #tpu.memory_space<vmem>>, vector<2x3xf32>
    tpu.vector_store %arg9[%c0_27, %c0_28], %51 {strides = array<i32>} : memref<2x3xf32, #tpu.memory_space<vmem>>, vector<2x3xf32>,
    return
  }
  func.func @transform_0(%arg0: i32) -> (i32, i32, i32) {
    %c0_i32 = arith.constant 0 : i32
    %c0_i32_0 = arith.constant 0 : i32
    %c0_i32_1 = arith.constant 0 : i32
    return %arg0, %c0_i32, %c0_i32_0 : i32, i32, i32
  }
  func.func @transform_1(%arg0: i32) -> (i32, i32, i32) {
    %c0_i32 = arith.constant 0 : i32
    %c0_i32_0 = arith.constant 0 : i32
    %c0_i32_1 = arith.constant 0 : i32
    return %arg0, %c0_i32, %c0_i32_0 : i32, i32, i32
  }
  func.func @transform_2(%arg0: i32) -> (i32, i32) {
    %c0_i32 = arith.constant 0 : i32
    %c0_i32_0 = arith.constant 0 : i32
    %c0_i32_1 = arith.constant 0 : i32
    return %c0_i32, %c0_i32_0 : i32, i32
  }
  func.func @transform_3(%arg0: i32) -> (i32, i32) {
    %c0_i32 = arith.constant 0 : i32
    %c0_i32_0 = arith.constant 0 : i32
    %c0_i32_1 = arith.constant 0 : i32
    return %c0_i32, %c0_i32_0 : i32, i32
  }
  func.func @transform_4(%arg0: i32) -> (i32, i32) {
    %c0_i32 = arith.constant 0 : i32
    %c0_i32_0 = arith.constant 0 : i32
    %c0_i32_1 = arith.constant 0 : i32
    return %c0_i32, %c0_i32_0 : i32, i32
  }
  func.func @transform_5(%arg0: i32) -> (i32, i32) {
    %c0_i32 = arith.constant 0 : i32
    %c0_i32_0 = arith.constant 0 : i32
    %c0_i32_1 = arith.constant 0 : i32
    return %c0_i32, %c0_i32_0 : i32, i32
  }
  func.func @transform_6(%arg0: i32) -> (i32, i32) {
    %c0_i32 = arith.constant 0 : i32
    %c0_i32_0 = arith.constant 0 : i32
    %c0_i32_1 = arith.constant 0 : i32
    return %c0_i32, %c0_i32_0 : i32, i32
  }
  func.func @transform_7(%arg0: i32) -> (i32, i32) {
    %c0_i32 = arith.constant 0 : i32
    %c0_i32_0 = arith.constant 0 : i32
    %c0_i32_1 = arith.constant 0 : i32
    return %c0_i32, %c0_i32_0 : i32, i32
  }
  func.func @transform_8(%arg0: i32) -> (i32, i32) {
    %c0_i32 = arith.constant 0 : i32
    %c0_i32_0 = arith.constant 0 : i32
    return %arg0, %c0_i32 : i32, i32
  }
}

</mosaic_0001>

<llo_original>
// kernel: language_inference_forward.1
$region0: #{language_inference_forward.1}
  #allocation0 [shape = 'u32[]', space=smem, size = 0x4, offset = 0x4, fixed_abs, tag = 'smem constant byte address 0x4 - core index']
  #allocation1 [shape = 'u32[72,128]{1,0:T(1,128)}', space=vmem, size = 0x9000, scoped, tag = 'internal scratch']
  %s0 = inlined_call_operand.vmem [shape: bf16[2,10,32], index: 0, kind: input, shape index: {}]
  %s1 = inlined_call_operand.vmem [shape: bf16[2,10,32], index: 1, kind: input, shape index: {}]
  %s2 = inlined_call_operand.vmem [shape: bf16[96,64], index: 2, kind: input, shape index: {}]
  %s3 = inlined_call_operand.vmem [shape: f32[1,64], index: 3, kind: input, shape index: {}]
  %s4 = inlined_call_operand.vmem [shape: bf16[128,128], index: 4, kind: input, shape index: {}]
  %s5 = inlined_call_operand.vmem [shape: f32[1,128], index: 5, kind: input, shape index: {}]
  %s6 = inlined_call_operand.vmem [shape: bf16[128,3], index: 6, kind: input, shape index: {}]
  %s7 = inlined_call_operand.vmem [shape: f32[1,3], index: 7, kind: input, shape index: {}]
  %s8 = inlined_call_operand.hbm [shape: f32[2,3], index: 8, kind: output, shape index: {}]
  %s9 = sld [smem:[#allocation0]]
  $region42: #{language_inference_forward.1} parent=0
    _
  %s11 = ssub.s32 1, %s9
  %s12 = scalar_select 0, %s11, %s9
  $region1: #{language_inference_forward.1} parent=0
    #allocation2 [shape = 'u8[1024]{0}', space=vmem, size = 0x400, scoped, tag = 'output window, operand 0, single buffered']
    #allocation3 [shape = 's32[1]{0}', space=sflag, size = 0x4, scoped, tag = 'scoped memory for language_inference_forward.1']
    %13 = vsyncpa [#allocation3], 0
    // Predicated region
    $region2: #{language_inference_forward.1} parent=1 // pred_check
      _
    $region3: #{language_inference_forward.1} parent=1 // pred_check_branch
      %15 = sbr.rel (0) target = $region5
    $region4: #{language_inference_forward.1} parent=1 // pred_region
      _
    $region5: #{language_inference_forward.1} parent=1 // pred_fallthru
      _
    // Predicated region
    $region6: #{language_inference_forward.1} parent=1 // pred_check
      _
    $region7: #{language_inference_forward.1} parent=1 // pred_check_branch
      %17 = sbr.rel (0) target = $region9
    $region8: #{language_inference_forward.1} parent=1 // pred_region
      _
    $region9: #{language_inference_forward.1} parent=1 // pred_fallthru
      _
    // Predicated region
    $region10: #{language_inference_forward.1} parent=1 // pred_check
      _
    $region11: #{language_inference_forward.1} parent=1 // pred_check_branch
      %19 = sbr.rel (0) target = $region13
    $region12: #{language_inference_forward.1} parent=1 // pred_region
      _
    $region13: #{language_inference_forward.1} parent=1 // pred_fallthru
      _
    // Predicated region
    $region14: #{language_inference_forward.1} parent=1 // pred_check
      _
    $region15: #{language_inference_forward.1} parent=1 // pred_check_branch
      %21 = sbr.rel (0) target = $region17
    $region16: #{language_inference_forward.1} parent=1 // pred_region
      _
    $region17: #{language_inference_forward.1} parent=1 // pred_fallthru
      _
    // Predicated region
    $region18: #{language_inference_forward.1} parent=1 // pred_check
      _
    $region19: #{language_inference_forward.1} parent=1 // pred_check_branch
      %23 = sbr.rel (0) target = $region21
    $region20: #{language_inference_forward.1} parent=1 // pred_region
      _
    $region21: #{language_inference_forward.1} parent=1 // pred_fallthru
      _
    // Predicated region
    $region22: #{language_inference_forward.1} parent=1 // pred_check
      _
    $region23: #{language_inference_forward.1} parent=1 // pred_check_branch
      %25 = sbr.rel (0) target = $region25
    $region24: #{language_inference_forward.1} parent=1 // pred_region
      _
    $region25: #{language_inference_forward.1} parent=1 // pred_fallthru
      _
    // Predicated region
    $region26: #{language_inference_forward.1} parent=1 // pred_check
      _
    $region27: #{language_inference_forward.1} parent=1 // pred_check_branch
      %27 = sbr.rel (0) target = $region29
    $region28: #{language_inference_forward.1} parent=1 // pred_region
      _
    $region29: #{language_inference_forward.1} parent=1 // pred_fallthru
      _
    // Predicated region
    $region30: #{language_inference_forward.1} parent=1 // pred_check
      _
    $region31: #{language_inference_forward.1} parent=1 // pred_check_branch
      %29 = sbr.rel (0) target = $region33
    $region32: #{language_inference_forward.1} parent=1 // pred_region
      _
    $region33: #{language_inference_forward.1} parent=1 // pred_fallthru
      _
    %v31 = vld [vmem:[%s2] sm:$0xf]
    %v32 = vld [vmem:[%s2 + $0x4] sm:$0xf]
    %v33 = vld [vmem:[%s2 + $0x8] sm:$0xf]
    %v34 = vld [vmem:[%s2 + $0xc] sm:$0xf]
    %v35 = vld [vmem:[%s2 + $0x10] sm:$0xf]
    %v36 = vld [vmem:[%s2 + $0x14] sm:$0xf]
    %v37 = vld [vmem:[%s2 + $0x18] sm:$0xf]
    %v38 = vld [vmem:[%s2 + $0x1c] sm:$0xf]
    %v39 = vld [vmem:[%s2 + $0x20] sm:$0xf]
    %v40 = vld [vmem:[%s2 + $0x24] sm:$0xf]
    %v41 = vld [vmem:[%s2 + $0x28] sm:$0xf]
    %v42 = vld [vmem:[%s2 + $0x2c] sm:$0xf]
    %v43 = vld [vmem:[%s3] sm:$0x1]
    %v44 = vld [vmem:[%s0] sm:$0xf]
    %v45 = vld [vmem:[%s0 + $0x4] sm:$0x1]
    %v46 = vld [vmem:[%s0 + $0x8] sm:$0xf]
    %v47 = vld [vmem:[%s0 + $0xc] sm:$0x1]
    %v52 = vunpack.c.l.b16 %v44
    %v53 = vunpack.c.l.b16 %v45
    %v54 = vunpack.c.l.b16 %v46
    %v55 = vunpack.c.l.b16 %v47
    %v56 = vpack.c.b16 %v53, %v52
    %v57 = vpack.c.b16 %v55, %v54
    %v59 = vshrl.u32 %v56, 16
    %v61 = vshll.u32 %v56, 16
    %v63 = vrot.slane %v61, 1
    %v64 = vor.u32 %v59, %v63
    %v66 = vshrl.u32 %v57, 16
    %v68 = vshll.u32 %v57, 16
    %v70 = vrot.slane %v68, 1
    %v71 = vor.u32 %v66, %v70
    %72 = vrot.lane.b32.xlu0 %v64, 32
    %v73 = vpop.permute.xlu0 %72
    %74 = vrot.lane.b32.xlu0 %v71, 32
    %v75 = vpop.permute.xlu0 %74
    %v76 = vrot.slane %v56, 1
    %v77 = vrot.slane %v57, 1
    %78 = vrot.lane.b32.xlu0 %v76, 64
    %v79 = vpop.permute.xlu0 %78
    %80 = vrot.lane.b32.xlu0 %v77, 64
    %v81 = vpop.permute.xlu0 %80
    %vm82 = vcmask 261120
    %v85 = vsel %vm82, %v44, %v73
    %v88 = vsel %vm82, %v46, %v75
    %vm89 = vcmask 523264
    %v91 = vsel %vm89, %v85, %v79
    %v93 = vsel %vm89, %v88, %v81
    %v95 = vperm.slane %v43, 0
    %v109 = vunpack.c.l.b16 %v31
    %v110 = vunpack.c.l.b16 %v32
    %v111 = vunpack.c.l.b16 %v33
    %v112 = vunpack.c.l.b16 %v34
    %v113 = vunpack.c.l.b16 %v35
    %v114 = vunpack.c.l.b16 %v36
    %v115 = vunpack.c.l.b16 %v37
    %v116 = vunpack.c.l.b16 %v38
    %v117 = vunpack.c.l.b16 %v39
    %v118 = vunpack.c.l.b16 %v40
    %v119 = vunpack.c.l.b16 %v41
    %v120 = vunpack.c.l.b16 %v42
    %v121 = vpack.c.b16 %v110, %v109
    %v122 = vpack.c.b16 %v112, %v111
    %v123 = vpack.c.b16 %v114, %v113
    %v124 = vpack.c.b16 %v116, %v115
    %v125 = vpack.c.b16 %v118, %v117
    %v126 = vpack.c.b16 %v120, %v119
    %vm133 = vcmask 785408
    %v134 = vsel %vm133, %v91, 0
    %136 = vmatpush.bf16.msra.mxu0 0
    %137 = vmatpush.bf16.msra.mxu0 0
    %138 = vmatpush.bf16.msra.mxu0 %v126
    %139 = vmatpush.bf16.msra.mxu0 %v125
    %140 = vmatpush.bf16.msra.mxu0 %v124
    %141 = vmatpush.bf16.msra.mxu0 %v123
    %142 = vmatpush.bf16.msra.mxu0 %v122
    %143 = vmatpush.bf16.msra.mxu0 %v121
    %144 = vmatmul.bf16.gmra.mxu0 %v134
    %v145 = vpop.f32.mrf.mxu0
    %v146 = vadd.f32 %v95, %v145
    %v147 = vpop.f32.mrf.mxu0
    %148 = vdwg.mxu0
    %v149 = vsel %vm133, %v93, 0
    %151 = vmatpush.bf16.msra.mxu0 0
    %152 = vmatpush.bf16.msra.mxu0 0
    %153 = vmatpush.bf16.msra.mxu0 %v126
    %154 = vmatpush.bf16.msra.mxu0 %v125
    %155 = vmatpush.bf16.msra.mxu0 %v124
    %156 = vmatpush.bf16.msra.mxu0 %v123
    %157 = vmatpush.bf16.msra.mxu0 %v122
    %158 = vmatpush.bf16.msra.mxu0 %v121
    %159 = vmatmul.bf16.gmra.mxu0 %v149
    %v160 = vpop.f32.mrf.mxu0
    %v161 = vadd.f32 %v95, %v160
    %v162 = vpop.f32.mrf.mxu0
    %163 = vdwg.mxu0
    %v164 = vmax.f32 %v146, 0.0
    %v165 = vmax.f32 %v161, 0.0
    %v166 = vsel %vm89, %v164, -inf
    %v167 = vrot.slane %v166, 4
    %v168 = vmax.f32 %v166, %v167
    %v169 = vrot.slane %v168, 2
    %v170 = vmax.f32 %v168, %v169
    %v171 = vrot.slane %v170, 1
    %v172 = vmax.f32 %v170, %v171
    %v173 = vsel %vm89, %v165, -inf
    %v174 = vrot.slane %v173, 4
    %v175 = vmax.f32 %v173, %v174
    %v176 = vrot.slane %v175, 2
    %v177 = vmax.f32 %v175, %v176
    %v178 = vrot.slane %v177, 1
    %v179 = vmax.f32 %v177, %v178
    %v180 = vld [vmem:[%s1] sm:$0xf]
    %v181 = vld [vmem:[%s1 + $0x4] sm:$0x1]
    %v182 = vld [vmem:[%s1 + $0x8] sm:$0xf]
    %v183 = vld [vmem:[%s1 + $0xc] sm:$0x1]
    %v188 = vunpack.c.l.b16 %v180
    %v189 = vunpack.c.l.b16 %v181
    %v190 = vunpack.c.l.b16 %v182
    %v191 = vunpack.c.l.b16 %v183
    %v192 = vpack.c.b16 %v189, %v188
    %v193 = vpack.c.b16 %v191, %v190
    %v195 = vshrl.u32 %v192, 16
    %v197 = vshll.u32 %v192, 16
    %v199 = vrot.slane %v197, 1
    %v200 = vor.u32 %v195, %v199
    %v202 = vshrl.u32 %v193, 16
    %v204 = vshll.u32 %v193, 16
    %v206 = vrot.slane %v204, 1
    %v207 = vor.u32 %v202, %v206
    %208 = vrot.lane.b32.xlu0 %v200, 32
    %v209 = vpop.permute.xlu0 %208
    %210 = vrot.lane.b32.xlu0 %v207, 32
    %v211 = vpop.permute.xlu0 %210
    %v212 = vrot.slane %v192, 1
    %v213 = vrot.slane %v193, 1
    %214 = vrot.lane.b32.xlu0 %v212, 64
    %v215 = vpop.permute.xlu0 %214
    %216 = vrot.lane.b32.xlu0 %v213, 64
    %v217 = vpop.permute.xlu0 %216
    %v220 = vsel %vm82, %v180, %v209
    %v223 = vsel %vm82, %v182, %v211
    %v225 = vsel %vm89, %v220, %v215
    %v227 = vsel %vm89, %v223, %v217
    %v228 = vsel %vm133, %v225, 0
    %230 = vmatpush.bf16.msra.mxu0 0
    %231 = vmatpush.bf16.msra.mxu0 0
    %232 = vmatpush.bf16.msra.mxu0 %v126
    %233 = vmatpush.bf16.msra.mxu0 %v125
    %234 = vmatpush.bf16.msra.mxu0 %v124
    %235 = vmatpush.bf16.msra.mxu0 %v123
    %236 = vmatpush.bf16.msra.mxu0 %v122
    %237 = vmatpush.bf16.msra.mxu0 %v121
    %238 = vmatmul.bf16.gmra.mxu0 %v228
    %v239 = vpop.f32.mrf.mxu0
    %v240 = vadd.f32 %v95, %v239
    %v241 = vpop.f32.mrf.mxu0
    %242 = vdwg.mxu0
    %v243 = vsel %vm133, %v227, 0
    %245 = vmatpush.bf16.msra.mxu0 0
    %246 = vmatpush.bf16.msra.mxu0 0
    %247 = vmatpush.bf16.msra.mxu0 %v126
    %248 = vmatpush.bf16.msra.mxu0 %v125
    %249 = vmatpush.bf16.msra.mxu0 %v124
    %250 = vmatpush.bf16.msra.mxu0 %v123
    %251 = vmatpush.bf16.msra.mxu0 %v122
    %252 = vmatpush.bf16.msra.mxu0 %v121
    %253 = vmatmul.bf16.gmra.mxu0 %v243
    %v254 = vpop.f32.mrf.mxu0
    %v255 = vadd.f32 %v95, %v254
    %v256 = vpop.f32.mrf.mxu0
    %257 = vdwg.mxu0
    %v258 = vmax.f32 %v240, 0.0
    %v259 = vmax.f32 %v255, 0.0
    %v260 = vsel %vm89, %v258, -inf
    %v261 = vrot.slane %v260, 4
    %v262 = vmax.f32 %v260, %v261
    %v263 = vrot.slane %v262, 2
    %v264 = vmax.f32 %v262, %v263
    %v265 = vrot.slane %v264, 1
    %v266 = vmax.f32 %v264, %v265
    %v267 = vsel %vm89, %v259, -inf
    %v268 = vrot.slane %v267, 4
    %v269 = vmax.f32 %v267, %v268
    %v270 = vrot.slane %v269, 2
    %v271 = vmax.f32 %v269, %v270
    %v272 = vrot.slane %v271, 1
    %v273 = vmax.f32 %v271, %v272
    %vm276 = vcmask 1041409
    %v277 = vsel %vm276, %v179, %v172
    %v281 = vsel %vm276, %v273, %v266
    %282 = vrot.lane.b32.xlu0 %v281, 64
    %v283 = vpop.permute.xlu0 %282
    %v285 = vsel %vm89, %v277, %v283
    %v286 = vpack.c.bf16 %v285, %v285
    %v287 = vld [vmem:[%s4] sm:$0xf]
    %v288 = vld [vmem:[%s4 + $0x4] sm:$0xf]
    %v289 = vld [vmem:[%s4 + $0x8] sm:$0xf]
    %v290 = vld [vmem:[%s4 + $0xc] sm:$0xf]
    %v291 = vld [vmem:[%s4 + $0x10] sm:$0xf]
    %v292 = vld [vmem:[%s4 + $0x14] sm:$0xf]
    %v293 = vld [vmem:[%s4 + $0x18] sm:$0xf]
    %v294 = vld [vmem:[%s4 + $0x1c] sm:$0xf]
    %v295 = vld [vmem:[%s4 + $0x20] sm:$0xf]
    %v296 = vld [vmem:[%s4 + $0x24] sm:$0xf]
    %v297 = vld [vmem:[%s4 + $0x28] sm:$0xf]
    %v298 = vld [vmem:[%s4 + $0x2c] sm:$0xf]
    %v299 = vld [vmem:[%s4 + $0x30] sm:$0xf]
    %v300 = vld [vmem:[%s4 + $0x34] sm:$0xf]
    %v301 = vld [vmem:[%s4 + $0x38] sm:$0xf]
    %v302 = vld [vmem:[%s4 + $0x3c] sm:$0xf]
    %v303 = vld [vmem:[%s5] sm:$0x1]
    %v305 = vperm.slane %v303, 0
    %v323 = vunpack.c.l.b16 %v287
    %v324 = vunpack.c.l.b16 %v288
    %v325 = vunpack.c.l.b16 %v289
    %v326 = vunpack.c.l.b16 %v290
    %v327 = vunpack.c.l.b16 %v291
    %v328 = vunpack.c.l.b16 %v292
    %v329 = vunpack.c.l.b16 %v293
    %v330 = vunpack.c.l.b16 %v294
    %v331 = vunpack.c.l.b16 %v295
    %v332 = vunpack.c.l.b16 %v296
    %v333 = vunpack.c.l.b16 %v297
    %v334 = vunpack.c.l.b16 %v298
    %v335 = vunpack.c.l.b16 %v299
    %v336 = vunpack.c.l.b16 %v300
    %v337 = vunpack.c.l.b16 %v301
    %v338 = vunpack.c.l.b16 %v302
    %v339 = vpack.c.b16 %v324, %v323
    %v340 = vpack.c.b16 %v326, %v325
    %v341 = vpack.c.b16 %v328, %v327
    %v342 = vpack.c.b16 %v330, %v329
    %v343 = vpack.c.b16 %v332, %v331
    %v344 = vpack.c.b16 %v334, %v333
    %v345 = vpack.c.b16 %v336, %v335
    %v346 = vpack.c.b16 %v338, %v337
    %355 = vmatpush.bf16.msra.mxu0 %v346
    %356 = vmatpush.bf16.msra.mxu0 %v345
    %357 = vmatpush.bf16.msra.mxu0 %v344
    %358 = vmatpush.bf16.msra.mxu0 %v343
    %359 = vmatpush.bf16.msra.mxu0 %v342
    %360 = vmatpush.bf16.msra.mxu0 %v341
    %361 = vmatpush.bf16.msra.mxu0 %v340
    %362 = vmatpush.bf16.msra.mxu0 %v339
    %363 = vmatmul.bf16.gmra.mxu0 %v286
    %v364 = vpop.f32.mrf.mxu0
    %v365 = vadd.f32 %v305, %v364
    %v366 = vpop.f32.mrf.mxu0
    %367 = vdwg.mxu0
    %v368 = vmax.f32 %v365, 0.0
    %v369 = vpack.c.bf16 %v368, %v368
    %v370 = vld [vmem:[%s6] sm:$0xf]
    %v371 = vld [vmem:[%s6 + $0x4] sm:$0xf]
    %v372 = vld [vmem:[%s6 + $0x8] sm:$0xf]
    %v373 = vld [vmem:[%s6 + $0xc] sm:$0xf]
    %v374 = vld [vmem:[%s6 + $0x10] sm:$0xf]
    %v375 = vld [vmem:[%s6 + $0x14] sm:$0xf]
    %v376 = vld [vmem:[%s6 + $0x18] sm:$0xf]
    %v377 = vld [vmem:[%s6 + $0x1c] sm:$0xf]
    %v378 = vld [vmem:[%s6 + $0x20] sm:$0xf]
    %v379 = vld [vmem:[%s6 + $0x24] sm:$0xf]
    %v380 = vld [vmem:[%s6 + $0x28] sm:$0xf]
    %v381 = vld [vmem:[%s6 + $0x2c] sm:$0xf]
    %v382 = vld [vmem:[%s6 + $0x30] sm:$0xf]
    %v383 = vld [vmem:[%s6 + $0x34] sm:$0xf]
    %v384 = vld [vmem:[%s6 + $0x38] sm:$0xf]
    %v385 = vld [vmem:[%s6 + $0x3c] sm:$0xf]
    %v386 = vld [vmem:[%s7] sm:$0x1]
    %v388 = vperm.slane %v386, 0
    %v406 = vunpack.c.l.b16 %v370
    %v407 = vunpack.c.l.b16 %v371
    %v408 = vunpack.c.l.b16 %v372
    %v409 = vunpack.c.l.b16 %v373
    %v410 = vunpack.c.l.b16 %v374
    %v411 = vunpack.c.l.b16 %v375
    %v412 = vunpack.c.l.b16 %v376
    %v413 = vunpack.c.l.b16 %v377
    %v414 = vunpack.c.l.b16 %v378
    %v415 = vunpack.c.l.b16 %v379
    %v416 = vunpack.c.l.b16 %v380
    %v417 = vunpack.c.l.b16 %v381
    %v418 = vunpack.c.l.b16 %v382
    %v419 = vunpack.c.l.b16 %v383
    %v420 = vunpack.c.l.b16 %v384
    %v421 = vunpack.c.l.b16 %v385
    %v422 = vpack.c.b16 %v407, %v406
    %v423 = vpack.c.b16 %v409, %v408
    %v424 = vpack.c.b16 %v411, %v410
    %v425 = vpack.c.b16 %v413, %v412
    %v426 = vpack.c.b16 %v415, %v414
    %v427 = vpack.c.b16 %v417, %v416
    %v428 = vpack.c.b16 %v419, %v418
    %v429 = vpack.c.b16 %v421, %v420
    %438 = vmatpush.bf16.msra.mxu0 %v429
    %439 = vmatpush.bf16.msra.mxu0 %v428
    %440 = vmatpush.bf16.msra.mxu0 %v427
    %441 = vmatpush.bf16.msra.mxu0 %v426
    %442 = vmatpush.bf16.msra.mxu0 %v425
    %443 = vmatpush.bf16.msra.mxu0 %v424
    %444 = vmatpush.bf16.msra.mxu0 %v423
    %445 = vmatpush.bf16.msra.mxu0 %v422
    %446 = vmatmul.bf16.gmra.mxu0 %v369
    %v447 = vpop.f32.mrf.mxu0
    %v448 = vadd.f32 %v388, %v447
    %v449 = vpop.f32.mrf.mxu0
    %450 = vdwg.mxu0
    %vm451 = vcmask 17408
    %v452 = vsel %vm451, %v448, -inf
    %453 = vmax.xlane.f32.xlu0 %v452
    %v454 = vpop.xlane.xlu0 %453
    %v455 = vsub.f32 %v448, %v454
    %v456 = vmul.f32 %v455, 1.442695
    %v457 = vpow.pop %v456
    %v458 = vsel %vm451, %v457, 0.0
    %459 = vadd.xlane.f32.xlu0 %v458
    %v460 = vpop.xlane.xlu0 %459
    %v461 = vlog2.pop %v460
    %v462 = vmul.f32 %v461, 0.6931472
    %v463 = vsub.f32 %v455, %v462
    %464 = vst.msk [vmem:[#allocation2] sm:$0x3] %vm451, %v463
    // Predicated region
    $region34: #{language_inference_forward.1} parent=1 // pred_check
      _
    $region35: #{language_inference_forward.1} parent=1 // pred_check_branch
      %466 = sbr.rel (0) target = $region37
    $region36: #{language_inference_forward.1} parent=1 // pred_region
      %468 = vsyncadd [#allocation3], 0
      %s470 = sshll.u32 [#allocation2], 4
      %s471 = int_to_ptr.vmem [resolvable:$true] %s470
      %s472 = sshll.u32 %s8, 4
      %s473 = int_to_ptr.hbm [resolvable:$true] %s472
      %475 = dma.vmem_to_hbm [thread:$0]  %s471, 32, %s473, [#allocation3]
    $region37: #{language_inference_forward.1} parent=1 // pred_fallthru
      _
    // Predicated region
    $region38: #{language_inference_forward.1} parent=1 // pred_check
      _
    $region39: #{language_inference_forward.1} parent=1 // pred_check_branch
      %477 = sbr.rel (0) target = $region41
    $region40: #{language_inference_forward.1} parent=1 // pred_region
      %479 = dma.done [#allocation3], 32
    $region41: #{language_inference_forward.1} parent=1 // pred_fallthru
      _
    %480 = vsyncpa [#allocation3], 1

</llo_original>
